<compile_context>
chip_gen: v5e
topology: v5e:2x2
jax: 0.10.0
libtpu: 0.0.40
codegen_flags: <defaults>
</compile_context>

<pallas_src>
import functools

import jax
import jax.numpy as jnp
from jax import lax
from jax.experimental import pallas as pl
from jax.experimental.pallas import tpu as pltpu

_EPS = 1e-10


def _round_up(x: int, m: int) -> int:
    return ((x + m - 1) // m) * m


def _distance_kernel(support_ref, query_ref, out_ref, acc_ref, nrm_ref, *, mxu_dtype):
    k = pl.program_id(2)

    @pl.when(k == 0)
    def _init():
        acc_ref[...] = jnp.zeros_like(acc_ref)
        nrm_ref[...] = jnp.zeros_like(nrm_ref)

    support = support_ref[...]  # (ts, tk) f32
    query = query_ref[...]      # (tq, tk) f32

    if mxu_dtype is None:
        q_in, s_in = query, support
        prec = lax.Precision.HIGHEST          # f32 parity with torch bmm
    else:
        q_in, s_in = query.astype(mxu_dtype), support.astype(mxu_dtype)
        prec = None                           # native low-precision MXU path

    # Main similarity: contract over D with no transpose -> (tq, ts) f32 accumulate.
    acc_ref[...] += lax.dot_general(
        q_in, s_in,
        dimension_numbers=(((1,), (1,)), ((), ())),
        preferred_element_type=jnp.float32,
        precision=prec,
    )

    # Per-support-row squared-norm contribution of this K tile, computed on the
    # MXU directly into a lane-major (8, ts) layout (no XLU reduce / transpose).
    # Costs ~8/tq of the main matmul; always f32 for norm accuracy.
    tk = support_ref.shape[1]
    ones = jnp.ones((8, tk), jnp.float32)
    nrm_ref[...] += lax.dot_general(
        ones, support * support,
        dimension_numbers=(((1,), (1,)), ((), ())),
        preferred_element_type=jnp.float32,
        precision=lax.Precision.HIGHEST,
    )

    @pl.when(k == pl.num_programs(2) - 1)
    def _finalize():
        # rsqrt(clamp(||support_j||^2, eps, inf)) — EUP op, broadcast over rows.
        mag = lax.rsqrt(jnp.maximum(nrm_ref[0:1, :], _EPS))   # (1, ts)
        out_ref[...] = (acc_ref[...] * mag).astype(out_ref.dtype)


def distance_network(support_set: jax.Array, query_set: jax.Array,
                     *, mxu_dtype=None) -> jax.Array:
    """support_set: (S, D), query_set: (Q, D) -> similarity (Q, S) float32."""
    S, D = support_set.shape
    Q, D2 = query_set.shape
    if D != D2:
        raise ValueError("feature dims must match")

    # Tile sizes: lane-dense S/D (multiples of 128), sublane-aligned Q (mult of 8),
    # capped so double-buffered tiles + accumulator fit comfortably in v7x's VMEM.
    tq = min(_round_up(Q, 8), 256)
    ts = min(_round_up(S, 128), 512)
    tk = min(_round_up(D, 128), 512)
    Qp, Sp, Dp = _round_up(Q, tq), _round_up(S, ts), _round_up(D, tk)

    support_p = jnp.pad(support_set.astype(jnp.float32), ((0, Sp - S), (0, Dp - D)))
    query_p = jnp.pad(query_set.astype(jnp.float32), ((0, Qp - Q), (0, Dp - D)))

    grid = (Qp // tq, Sp // ts, Dp // tk)
    kernel = functools.partial(_distance_kernel, mxu_dtype=mxu_dtype)

    out_p = pl.pallas_call(
        kernel,
        out_shape=jax.ShapeDtypeStruct((Qp, Sp), jnp.float32),
        grid=grid,
        in_specs=[
            pl.BlockSpec((ts, tk), lambda i, j, k: (j, k)),   # support tile
            pl.BlockSpec((tq, tk), lambda i, j, k: (i, k)),   # query tile
        ],
        out_specs=pl.BlockSpec((tq, ts), lambda i, j, k: (i, j)),
        scratch_shapes=[
            pltpu.VMEM((tq, ts), jnp.float32),   # similarity accumulator
            pltpu.VMEM((8, ts), jnp.float32),    # support squared-norm accumulator
        ],
        compiler_params=pltpu.CompilerParams(
            dimension_semantics=("parallel", "parallel", "arbitrary"),
            vmem_limit_bytes=32 * 1024 * 1024,
        ),
    )(support_p, query_p)

    return out_p[:Q, :S]


def _reference(support_set, query_set):
    eps = 1e-10
    sum_support = jnp.sum(support_set.astype(jnp.float32) ** 2, axis=1)
    mag = lax.rsqrt(jnp.clip(sum_support, eps, None))
    sim = jnp.dot(query_set.astype(jnp.float32), support_set.astype(jnp.float32).T,
                  precision=lax.Precision.HIGHEST)
    return sim * mag[None, :]


if __name__ == "__main__":
    key = jax.random.PRNGKey(0)

    # Shapes implied by the module docstring: support = (way*shot, 64) = (5, 64),
    # query = (way*query, 64) = (25, 64).
    k1, k2, k3, k4 = jax.random.split(key, 4)
    support_set = jax.random.normal(k1, (5, 64), dtype=jnp.float32)
    query_set = jax.random.normal(k2, (25, 64), dtype=jnp.float32)

    out = jax.block_until_ready(distance_network(support_set, query_set))
    ref = _reference(support_set, query_set)
    assert out.shape == (25, 5)
    assert jnp.allclose(out, ref, atol=1e-5, rtol=1e-4), "mismatch vs reference (case 1)"

    # Second case exercises the K reduction grid axis (D > tk) and padding paths.
    support2 = jax.random.normal(k3, (10, 600), dtype=jnp.float32)
    query2 = jax.random.normal(k4, (40, 600), dtype=jnp.float32)
    out2 = jax.block_until_ready(distance_network(support2, query2))
    ref2 = _reference(support2, query2)
    assert out2.shape == (40, 10)
    assert jnp.allclose(out2, ref2, atol=1e-5, rtol=1e-4), "mismatch vs reference (case 2)"

    print("KERNEL_OK")
</pallas_src>

<mosaic_0001>
module attributes {stable_mosaic.version = 11 : i64} {
  func.func @_distance_kernel(%arg0: i32, %arg1: i32, %arg2: i32, %arg3: memref<128x128xf32, #tpu.memory_space<vmem>>, %arg4: memref<32x128xf32, #tpu.memory_space<vmem>>, %arg5: memref<32x128xf32, #tpu.memory_space<vmem>>, %arg6: memref<32x128xf32, #tpu.memory_space<vmem>>, %arg7: memref<8x128xf32, #tpu.memory_space<vmem>>) attributes {dimension_semantics = [#tpu.dimension_semantics<parallel>, #tpu.dimension_semantics<parallel>, #tpu.dimension_semantics<arbitrary>], iteration_bounds = array<i64: 1, 1, 1>, scalar_prefetch = 0 : i64, scratch_operands = 2 : i64, tpu.core_type = #tpu.core_type<tc>, window_params = [{transform_indices = @transform_0, window_bounds = array<i64: 128, 128>}, {transform_indices = @transform_1, window_bounds = array<i64: 32, 128>}, {transform_indices = @transform_2, window_bounds = array<i64: 32, 128>}]} {
    %c0_i32 = arith.constant 0 : i32
    %0 = arith.cmpi eq, %arg2, %c0_i32 : i32
    %1 = arith.extui %0 : i1 to i32
    %c0_i32_0 = arith.constant 0 : i32
    %2 = arith.cmpi ne, %1, %c0_i32_0 : i32
    scf.if %2 {
      %cst_16 = arith.constant 0.000000e+00 : f32
      %18 = vector.broadcast %cst_16 : f32 to vector<32x128xf32>
      %c0_17 = arith.constant 0 : index
      %c0_18 = arith.constant 0 : index
      %19 = vector.load %arg6[%c0_17, %c0_18] : memref<32x128xf32, #tpu.memory_space<vmem>>, vector<32x128xf32>
      tpu.vector_store %arg6[%c0_17, %c0_18], %18 {strides = array<i32>} : memref<32x128xf32, #tpu.memory_space<vmem>>, vector<32x128xf32>,
      %cst_19 = arith.constant 0.000000e+00 : f32
      %20 = vector.broadcast %cst_19 : f32 to vector<8x128xf32>
      %c0_20 = arith.constant 0 : index
      %c0_21 = arith.constant 0 : index
      %21 = vector.load %arg7[%c0_20, %c0_21] : memref<8x128xf32, #tpu.memory_space<vmem>>, vector<8x128xf32>
      tpu.vector_store %arg7[%c0_20, %c0_21], %20 {strides = array<i32>} : memref<8x128xf32, #tpu.memory_space<vmem>>, vector<8x128xf32>,
    } else {
    }
    %c0 = arith.constant 0 : index
    %c0_1 = arith.constant 0 : index
    %3 = vector.load %arg3[%c0, %c0_1] : memref<128x128xf32, #tpu.memory_space<vmem>>, vector<128x128xf32>
    %c0_2 = arith.constant 0 : index
    %c0_3 = arith.constant 0 : index
    %4 = vector.load %arg4[%c0_2, %c0_3] : memref<32x128xf32, #tpu.memory_space<vmem>>, vector<32x128xf32>
    %c0_4 = arith.constant 0 : index
    %c0_5 = arith.constant 0 : index
    %5 = vector.load %arg6[%c0_4, %c0_5] : memref<32x128xf32, #tpu.memory_space<vmem>>, vector<32x128xf32>
    %cst = arith.constant dense<0.000000e+00> : vector<32x128xf32>
    %6 = tpu.matmul %4, %3, %cst {dimension_numbers = #tpu.dot_dimension_numbers<[1], [1], [0], [0], [0, 0, 1, 0], [], []>, precision = #tpu.contract_precision<fp32>} : vector<32x128xf32>, vector<128x128xf32>, vector<32x128xf32> -> vector<32x128xf32>
    %7 = arith.addf %5, %6 : vector<32x128xf32>
    %c0_6 = arith.constant 0 : index
    %c0_7 = arith.constant 0 : index
    %8 = vector.load %arg6[%c0_6, %c0_7] : memref<32x128xf32, #tpu.memory_space<vmem>>, vector<32x128xf32>
    tpu.vector_store %arg6[%c0_6, %c0_7], %7 {strides = array<i32>} : memref<32x128xf32, #tpu.memory_space<vmem>>, vector<32x128xf32>,
    %cst_8 = arith.constant 1.000000e+00 : f32
    %9 = vector.broadcast %cst_8 : f32 to vector<8x128xf32>
    %c0_9 = arith.constant 0 : index
    %c0_10 = arith.constant 0 : index
    %10 = vector.load %arg7[%c0_9, %c0_10] : memref<8x128xf32, #tpu.memory_space<vmem>>, vector<8x128xf32>
    %11 = arith.mulf %3, %3 : vector<128x128xf32>
    %cst_11 = arith.constant dense<0.000000e+00> : vector<8x128xf32>
    %12 = tpu.matmul %9, %11, %cst_11 {dimension_numbers = #tpu.dot_dimension_numbers<[1], [1], [0], [0], [0, 0, 1, 0], [], []>, precision = #tpu.contract_precision<fp32>} : vector<8x128xf32>, vector<128x128xf32>, vector<8x128xf32> -> vector<8x128xf32>
    %13 = arith.addf %10, %12 : vector<8x128xf32>
    %c0_12 = arith.constant 0 : index
    %c0_13 = arith.constant 0 : index
    %14 = vector.load %arg7[%c0_12, %c0_13] : memref<8x128xf32, #tpu.memory_space<vmem>>, vector<8x128xf32>
    tpu.vector_store %arg7[%c0_12, %c0_13], %13 {strides = array<i32>} : memref<8x128xf32, #tpu.memory_space<vmem>>, vector<8x128xf32>,
    %c0_i32_14 = arith.constant 0 : i32
    %15 = arith.cmpi eq, %arg2, %c0_i32_14 : i32
    %16 = arith.extui %15 : i1 to i32
    %c0_i32_15 = arith.constant 0 : i32
    %17 = arith.cmpi ne, %16, %c0_i32_15 : i32
    scf.if %17 {
      %c0_16 = arith.constant 0 : index
      %c0_17 = arith.constant 0 : index
      %18 = vector.load %arg7[%c0_16, %c0_17] : memref<8x128xf32, #tpu.memory_space<vmem>>, vector<1x128xf32>
      %cst_18 = arith.constant 1.000000e-10 : f32
      %19 = vector.broadcast %cst_18 : f32 to vector<1x128xf32>
      %20 = arith.maximumf %18, %19 : vector<1x128xf32>
      %21 = math.rsqrt %20 : vector<1x128xf32>
      %c0_19 = arith.constant 0 : index
      %c0_20 = arith.constant 0 : index
      %22 = vector.load %arg6[%c0_19, %c0_20] : memref<32x128xf32, #tpu.memory_space<vmem>>, vector<32x128xf32>
      %23 = vector.broadcast %21 : vector<1x128xf32> to vector<32x128xf32>
      %24 = arith.mulf %22, %23 : vector<32x128xf32>
      %c0_21 = arith.constant 0 : index
      %c0_22 = arith.constant 0 : index
      %25 = vector.load %arg5[%c0_21, %c0_22] : memref<32x128xf32, #tpu.memory_space<vmem>>, vector<32x128xf32>
      tpu.vector_store %arg5[%c0_21, %c0_22], %24 {strides = array<i32>} : memref<32x128xf32, #tpu.memory_space<vmem>>, vector<32x128xf32>,
    } else {
    }
    return
  }
  func.func @transform_0(%arg0: i32, %arg1: i32, %arg2: i32) -> (i32, i32) {
    %c0_i32 = arith.constant 0 : i32
    return %arg1, %arg2 : i32, i32
  }
  func.func @transform_1(%arg0: i32, %arg1: i32, %arg2: i32) -> (i32, i32) {
    %c0_i32 = arith.constant 0 : i32
    return %arg0, %arg2 : i32, i32
  }
  func.func @transform_2(%arg0: i32, %arg1: i32, %arg2: i32) -> (i32, i32) {
    %c0_i32 = arith.constant 0 : i32
    return %arg0, %arg1 : i32, i32
  }
}

</mosaic_0001>

<llo_original>
// kernel: tpu_custom_call.1
$region0: #{tpu_custom_call.1}
  #allocation0 [shape = 'u32[]', space=smem, size = 0x4, offset = 0x4, fixed_abs, tag = 'smem constant byte address 0x4 - core index']
  #allocation1 [shape = 'u32[72,128]{1,0:T(1,128)}', space=vmem, size = 0x9000, scoped, tag = 'internal scratch']
  #allocation2 [shape = 'f32[32,128]{1,0:T(8,128)}', space=vmem, size = 0x4000, scoped, tag = 'scratch operand']
  #allocation3 [shape = 'f32[8,128]{1,0:T(8,128)}', space=vmem, size = 0x1000, scoped, tag = 'scratch operand']
  %s0 = inlined_call_operand.hbm [shape: f32[128,128], index: 0, kind: input, shape index: {}]
  %s1 = inlined_call_operand.hbm [shape: f32[32,128], index: 1, kind: input, shape index: {}]
  %s2 = inlined_call_operand.hbm [shape: f32[32,128], index: 2, kind: output, shape index: {}]
  %s3 = sld [smem:[#allocation0]]
  $region34: #{tpu_custom_call.1} parent=0
    _
  %s5 = ssub.s32 1, %s3
  %s6 = scalar_select 0, %s5, %s3
  $region1: #{tpu_custom_call.1} parent=0
    #allocation4 [shape = 'u8[65536]{0}', space=vmem, size = 0x10000, scoped, tag = 'input window, operand 0, single buffered']
    #allocation5 [shape = 's32[1]{0}', space=sflag, size = 0x4, scoped, tag = 'scoped memory for tpu_custom_call.1']
    #allocation6 [shape = 's32[1]{0}', space=sflag, size = 0x4, scoped, tag = 'scoped memory for tpu_custom_call.1']
    #allocation7 [shape = 'u8[16384]{0}', space=vmem, size = 0x4000, scoped, tag = 'input window, operand 1, single buffered']
    #allocation8 [shape = 's32[1]{0}', space=sflag, size = 0x4, scoped, tag = 'scoped memory for tpu_custom_call.1']
    #allocation9 [shape = 'u8[16384]{0}', space=vmem, size = 0x4000, scoped, tag = 'output window, operand 0, single buffered']
    %7 = vsyncpa [#allocation5], 0
    %8 = vsyncpa [#allocation8], 0
    %9 = vsyncpa [#allocation6], 0
    // Predicated region
    $region2: #{tpu_custom_call.1} parent=1 // pred_check
      _
    $region3: #{tpu_custom_call.1} parent=1 // pred_check_branch
      %11 = sbr.rel (0) target = $region5
    $region4: #{tpu_custom_call.1} parent=1 // pred_region
      %13 = vsyncadd [#allocation5], 0
      %s14 = sshll.u32 %s0, 4
      %s15 = int_to_ptr.hbm [resolvable:$true] %s14
      %s16 = sshll.u32 [#allocation4], 4
      %s17 = int_to_ptr.vmem [resolvable:$true] %s16
      %22 = dma.hbm_to_vmem [thread:$0]  %s15, 2048, %s17, [#allocation5], 128, 128, 8
    $region5: #{tpu_custom_call.1} parent=1 // pred_fallthru
      _
    // Predicated region
    $region6: #{tpu_custom_call.1} parent=1 // pred_check
      _
    $region7: #{tpu_custom_call.1} parent=1 // pred_check_branch
      %24 = sbr.rel (0) target = $region9
    $region8: #{tpu_custom_call.1} parent=1 // pred_region
      %26 = vsyncadd [#allocation8], 0
      %s27 = sshll.u32 %s1, 4
      %s28 = int_to_ptr.hbm [resolvable:$true] %s27
      %s29 = sshll.u32 [#allocation7], 4
      %s30 = int_to_ptr.vmem [resolvable:$true] %s29
      %35 = dma.hbm_to_vmem [thread:$0]  %s28, 512, %s30, [#allocation8], 128, 128, 8
    $region9: #{tpu_custom_call.1} parent=1 // pred_fallthru
      _
    // Predicated region
    $region10: #{tpu_custom_call.1} parent=1 // pred_check
      _
    $region11: #{tpu_custom_call.1} parent=1 // pred_check_branch
      %37 = sbr.rel (0) target = $region13
    $region12: #{tpu_custom_call.1} parent=1 // pred_region
      %39 = dma.done [#allocation5], 2048
    $region13: #{tpu_custom_call.1} parent=1 // pred_fallthru
      _
    // Predicated region
    $region14: #{tpu_custom_call.1} parent=1 // pred_check
      _
    $region15: #{tpu_custom_call.1} parent=1 // pred_check_branch
      %41 = sbr.rel (0) target = $region17
    $region16: #{tpu_custom_call.1} parent=1 // pred_region
      %43 = dma.done [#allocation8], 512
    $region17: #{tpu_custom_call.1} parent=1 // pred_fallthru
      _
    %p44 = scmp.eq.s32.totalorder 0, 0
    // Predicated region
    $region18: #{tpu_custom_call.1} parent=1 // pred_check
      %p45 = pneg %p44
    $region19: #{tpu_custom_call.1} parent=1 // pred_check_branch
      %47 = sbr.rel (%p45) target = $region21
    $region20: #{tpu_custom_call.1} parent=1 // pred_region
      %48 = vst [vmem:[#allocation2] sm:$0xff] 0.0
      %49 = vst [vmem:[#allocation2 + $0x8] sm:$0xff] 0.0
      %50 = vst [vmem:[#allocation2 + $0x10] sm:$0xff] 0.0
      %51 = vst [vmem:[#allocation2 + $0x18] sm:$0xff] 0.0
      %52 = vst [vmem:[#allocation3] sm:$0xff] 0.0
    $region21: #{tpu_custom_call.1} parent=1 // pred_fallthru
      _
    %v53 = vld [vmem:[#allocation4] sm:$0xff]
    %v54 = vld [vmem:[#allocation4 + $0x8] sm:$0xff]
    %v55 = vld [vmem:[#allocation4 + $0x10] sm:$0xff]
    %v56 = vld [vmem:[#allocation4 + $0x18] sm:$0xff]
    %v57 = vld [vmem:[#allocation4 + $0x20] sm:$0xff]
    %v58 = vld [vmem:[#allocation4 + $0x28] sm:$0xff]
    %v59 = vld [vmem:[#allocation4 + $0x30] sm:$0xff]
    %v60 = vld [vmem:[#allocation4 + $0x38] sm:$0xff]
    %v61 = vld [vmem:[#allocation4 + $0x40] sm:$0xff]
    %v62 = vld [vmem:[#allocation4 + $0x48] sm:$0xff]
    %v63 = vld [vmem:[#allocation4 + $0x50] sm:$0xff]
    %v64 = vld [vmem:[#allocation4 + $0x58] sm:$0xff]
    %v65 = vld [vmem:[#allocation4 + $0x60] sm:$0xff]
    %v66 = vld [vmem:[#allocation4 + $0x68] sm:$0xff]
    %v67 = vld [vmem:[#allocation4 + $0x70] sm:$0xff]
    %v68 = vld [vmem:[#allocation4 + $0x78] sm:$0xff]
    %v69 = vld [vmem:[#allocation7] sm:$0xff]
    %v70 = vld [vmem:[#allocation7 + $0x8] sm:$0xff]
    %v71 = vld [vmem:[#allocation7 + $0x10] sm:$0xff]
    %v72 = vld [vmem:[#allocation7 + $0x18] sm:$0xff]
    %v73 = vld [vmem:[#allocation2] sm:$0xff]
    %v74 = vld [vmem:[#allocation2 + $0x8] sm:$0xff]
    %v75 = vld [vmem:[#allocation2 + $0x10] sm:$0xff]
    %v76 = vld [vmem:[#allocation2 + $0x18] sm:$0xff]
    %v77 = vand.u32 %v68, 4294901760
    %78 = vmatpush.xpose.msra.mxu0 %v77
    %v79 = vand.u32 %v67, 4294901760
    %80 = vmatpush.xpose.msra.mxu0 %v79
    %v81 = vand.u32 %v66, 4294901760
    %82 = vmatpush.xpose.msra.mxu0 %v81
    %v83 = vand.u32 %v65, 4294901760
    %84 = vmatpush.xpose.msra.mxu0 %v83
    %v85 = vand.u32 %v64, 4294901760
    %86 = vmatpush.xpose.msra.mxu0 %v85
    %v87 = vand.u32 %v63, 4294901760
    %88 = vmatpush.xpose.msra.mxu0 %v87
    %v89 = vand.u32 %v62, 4294901760
    %90 = vmatpush.xpose.msra.mxu0 %v89
    %v91 = vand.u32 %v61, 4294901760
    %92 = vmatpush.xpose.msra.mxu0 %v91
    %v93 = vand.u32 %v60, 4294901760
    %94 = vmatpush.xpose.msra.mxu0 %v93
    %v95 = vand.u32 %v59, 4294901760
    %96 = vmatpush.xpose.msra.mxu0 %v95
    %v97 = vand.u32 %v58, 4294901760
    %98 = vmatpush.xpose.msra.mxu0 %v97
    %v99 = vand.u32 %v57, 4294901760
    %100 = vmatpush.xpose.msra.mxu0 %v99
    %v101 = vand.u32 %v56, 4294901760
    %102 = vmatpush.xpose.msra.mxu0 %v101
    %v103 = vand.u32 %v55, 4294901760
    %104 = vmatpush.xpose.msra.mxu0 %v103
    %v105 = vand.u32 %v54, 4294901760
    %106 = vmatpush.xpose.msra.mxu0 %v105
    %v107 = vand.u32 %v53, 4294901760
    %108 = vmatpush.xpose.msra.mxu0 %v107
    %v109 = vand.u32 %v69, 4294901760
    %v110 = vsub.f32 %v69, %v109
    %v111 = vand.u32 %v110, 4294901760
    %v112 = vsub.f32 %v110, %v111
    %v113 = vand.u32 %v112, 4294901760
    %114 = vmatmul.f32.gmra.mxu0 %v113
    %v115 = vpop.f32.mrf.mxu0
    %v116 = vadd.f32 0.0, %v115
    %v117 = vand.u32 %v70, 4294901760
    %v118 = vsub.f32 %v70, %v117
    %v119 = vand.u32 %v118, 4294901760
    %v120 = vsub.f32 %v118, %v119
    %v121 = vand.u32 %v120, 4294901760
    %122 = vmatmul.f32.gmra.mxu0 %v121
    %v123 = vpop.f32.mrf.mxu0
    %v124 = vadd.f32 0.0, %v123
    %v125 = vand.u32 %v71, 4294901760
    %v126 = vsub.f32 %v71, %v125
    %v127 = vand.u32 %v126, 4294901760
    %v128 = vsub.f32 %v126, %v127
    %v129 = vand.u32 %v128, 4294901760
    %130 = vmatmul.f32.gmra.mxu0 %v129
    %v131 = vpop.f32.mrf.mxu0
    %v132 = vadd.f32 0.0, %v131
    %v133 = vand.u32 %v72, 4294901760
    %v134 = vsub.f32 %v72, %v133
    %v135 = vand.u32 %v134, 4294901760
    %v136 = vsub.f32 %v134, %v135
    %v137 = vand.u32 %v136, 4294901760
    %138 = vmatmul.f32.gmra.mxu0 %v137
    %v139 = vpop.f32.mrf.mxu0
    %v140 = vadd.f32 0.0, %v139
    %141 = vdwg.mxu0
    %v142 = vand.u32 %v68, 4294901760
    %v143 = vsub.f32 %v68, %v142
    %v144 = vand.u32 %v143, 4294901760
    %v145 = vsub.f32 %v143, %v144
    %v146 = vand.u32 %v145, 4294901760
    %147 = vmatpush.xpose.msra.mxu0 %v146
    %v148 = vand.u32 %v67, 4294901760
    %v149 = vsub.f32 %v67, %v148
    %v150 = vand.u32 %v149, 4294901760
    %v151 = vsub.f32 %v149, %v150
    %v152 = vand.u32 %v151, 4294901760
    %153 = vmatpush.xpose.msra.mxu0 %v152
    %v154 = vand.u32 %v66, 4294901760
    %v155 = vsub.f32 %v66, %v154
    %v156 = vand.u32 %v155, 4294901760
    %v157 = vsub.f32 %v155, %v156
    %v158 = vand.u32 %v157, 4294901760
    %159 = vmatpush.xpose.msra.mxu0 %v158
    %v160 = vand.u32 %v65, 4294901760
    %v161 = vsub.f32 %v65, %v160
    %v162 = vand.u32 %v161, 4294901760
    %v163 = vsub.f32 %v161, %v162
    %v164 = vand.u32 %v163, 4294901760
    %165 = vmatpush.xpose.msra.mxu0 %v164
    %v166 = vand.u32 %v64, 4294901760
    %v167 = vsub.f32 %v64, %v166
    %v168 = vand.u32 %v167, 4294901760
    %v169 = vsub.f32 %v167, %v168
    %v170 = vand.u32 %v169, 4294901760
    %171 = vmatpush.xpose.msra.mxu0 %v170
    %v172 = vand.u32 %v63, 4294901760
    %v173 = vsub.f32 %v63, %v172
    %v174 = vand.u32 %v173, 4294901760
    %v175 = vsub.f32 %v173, %v174
    %v176 = vand.u32 %v175, 4294901760
    %177 = vmatpush.xpose.msra.mxu0 %v176
    %v178 = vand.u32 %v62, 4294901760
    %v179 = vsub.f32 %v62, %v178
    %v180 = vand.u32 %v179, 4294901760
    %v181 = vsub.f32 %v179, %v180
    %v182 = vand.u32 %v181, 4294901760
    %183 = vmatpush.xpose.msra.mxu0 %v182
    %v184 = vand.u32 %v61, 4294901760
    %v185 = vsub.f32 %v61, %v184
    %v186 = vand.u32 %v185, 4294901760
    %v187 = vsub.f32 %v185, %v186
    %v188 = vand.u32 %v187, 4294901760
    %189 = vmatpush.xpose.msra.mxu0 %v188
    %v190 = vand.u32 %v60, 4294901760
    %v191 = vsub.f32 %v60, %v190
    %v192 = vand.u32 %v191, 4294901760
    %v193 = vsub.f32 %v191, %v192
    %v194 = vand.u32 %v193, 4294901760
    %195 = vmatpush.xpose.msra.mxu0 %v194
    %v196 = vand.u32 %v59, 4294901760
    %v197 = vsub.f32 %v59, %v196
    %v198 = vand.u32 %v197, 4294901760
    %v199 = vsub.f32 %v197, %v198
    %v200 = vand.u32 %v199, 4294901760
    %201 = vmatpush.xpose.msra.mxu0 %v200
    %v202 = vand.u32 %v58, 4294901760
    %v203 = vsub.f32 %v58, %v202
    %v204 = vand.u32 %v203, 4294901760
    %v205 = vsub.f32 %v203, %v204
    %v206 = vand.u32 %v205, 4294901760
    %207 = vmatpush.xpose.msra.mxu0 %v206
    %v208 = vand.u32 %v57, 4294901760
    %v209 = vsub.f32 %v57, %v208
    %v210 = vand.u32 %v209, 4294901760
    %v211 = vsub.f32 %v209, %v210
    %v212 = vand.u32 %v211, 4294901760
    %213 = vmatpush.xpose.msra.mxu0 %v212
    %v214 = vand.u32 %v56, 4294901760
    %v215 = vsub.f32 %v56, %v214
    %v216 = vand.u32 %v215, 4294901760
    %v217 = vsub.f32 %v215, %v216
    %v218 = vand.u32 %v217, 4294901760
    %219 = vmatpush.xpose.msra.mxu0 %v218
    %v220 = vand.u32 %v55, 4294901760
    %v221 = vsub.f32 %v55, %v220
    %v222 = vand.u32 %v221, 4294901760
    %v223 = vsub.f32 %v221, %v222
    %v224 = vand.u32 %v223, 4294901760
    %225 = vmatpush.xpose.msra.mxu0 %v224
    %v226 = vand.u32 %v54, 4294901760
    %v227 = vsub.f32 %v54, %v226
    %v228 = vand.u32 %v227, 4294901760
    %v229 = vsub.f32 %v227, %v228
    %v230 = vand.u32 %v229, 4294901760
    %231 = vmatpush.xpose.msra.mxu0 %v230
    %v232 = vand.u32 %v53, 4294901760
    %v233 = vsub.f32 %v53, %v232
    %v234 = vand.u32 %v233, 4294901760
    %v235 = vsub.f32 %v233, %v234
    %v236 = vand.u32 %v235, 4294901760
    %237 = vmatpush.xpose.msra.mxu0 %v236
    %v238 = vand.u32 %v69, 4294901760
    %239 = vmatmul.f32.gmra.mxu0 %v238
    %v240 = vpop.f32.mrf.mxu0
    %v241 = vadd.f32 %v116, %v240
    %v242 = vand.u32 %v70, 4294901760
    %243 = vmatmul.f32.gmra.mxu0 %v242
    %v244 = vpop.f32.mrf.mxu0
    %v245 = vadd.f32 %v124, %v244
    %v246 = vand.u32 %v71, 4294901760
    %247 = vmatmul.f32.gmra.mxu0 %v246
    %v248 = vpop.f32.mrf.mxu0
    %v249 = vadd.f32 %v132, %v248
    %v250 = vand.u32 %v72, 4294901760
    %251 = vmatmul.f32.gmra.mxu0 %v250
    %v252 = vpop.f32.mrf.mxu0
    %v253 = vadd.f32 %v140, %v252
    %254 = vdwg.mxu0
    %v255 = vand.u32 %v68, 4294901760
    %v256 = vsub.f32 %v68, %v255
    %257 = vmatpush.xpose.msra.mxu0 %v256
    %v258 = vand.u32 %v67, 4294901760
    %v259 = vsub.f32 %v67, %v258
    %260 = vmatpush.xpose.msra.mxu0 %v259
    %v261 = vand.u32 %v66, 4294901760
    %v262 = vsub.f32 %v66, %v261
    %263 = vmatpush.xpose.msra.mxu0 %v262
    %v264 = vand.u32 %v65, 4294901760
    %v265 = vsub.f32 %v65, %v264
    %266 = vmatpush.xpose.msra.mxu0 %v265
    %v267 = vand.u32 %v64, 4294901760
    %v268 = vsub.f32 %v64, %v267
    %269 = vmatpush.xpose.msra.mxu0 %v268
    %v270 = vand.u32 %v63, 4294901760
    %v271 = vsub.f32 %v63, %v270
    %272 = vmatpush.xpose.msra.mxu0 %v271
    %v273 = vand.u32 %v62, 4294901760
    %v274 = vsub.f32 %v62, %v273
    %275 = vmatpush.xpose.msra.mxu0 %v274
    %v276 = vand.u32 %v61, 4294901760
    %v277 = vsub.f32 %v61, %v276
    %278 = vmatpush.xpose.msra.mxu0 %v277
    %v279 = vand.u32 %v60, 4294901760
    %v280 = vsub.f32 %v60, %v279
    %281 = vmatpush.xpose.msra.mxu0 %v280
    %v282 = vand.u32 %v59, 4294901760
    %v283 = vsub.f32 %v59, %v282
    %284 = vmatpush.xpose.msra.mxu0 %v283
    %v285 = vand.u32 %v58, 4294901760
    %v286 = vsub.f32 %v58, %v285
    %287 = vmatpush.xpose.msra.mxu0 %v286
    %v288 = vand.u32 %v57, 4294901760
    %v289 = vsub.f32 %v57, %v288
    %290 = vmatpush.xpose.msra.mxu0 %v289
    %v291 = vand.u32 %v56, 4294901760
    %v292 = vsub.f32 %v56, %v291
    %293 = vmatpush.xpose.msra.mxu0 %v292
    %v294 = vand.u32 %v55, 4294901760
    %v295 = vsub.f32 %v55, %v294
    %296 = vmatpush.xpose.msra.mxu0 %v295
    %v297 = vand.u32 %v54, 4294901760
    %v298 = vsub.f32 %v54, %v297
    %299 = vmatpush.xpose.msra.mxu0 %v298
    %v300 = vand.u32 %v53, 4294901760
    %v301 = vsub.f32 %v53, %v300
    %302 = vmatpush.xpose.msra.mxu0 %v301
    %v303 = vand.u32 %v69, 4294901760
    %v304 = vsub.f32 %v69, %v303
    %305 = vmatmul.f32.gmra.mxu0 %v304
    %v306 = vpop.f32.mrf.mxu0
    %v307 = vadd.f32 %v241, %v306
    %v308 = vand.u32 %v70, 4294901760
    %v309 = vsub.f32 %v70, %v308
    %310 = vmatmul.f32.gmra.mxu0 %v309
    %v311 = vpop.f32.mrf.mxu0
    %v312 = vadd.f32 %v245, %v311
    %v313 = vand.u32 %v71, 4294901760
    %v314 = vsub.f32 %v71, %v313
    %315 = vmatmul.f32.gmra.mxu0 %v314
    %v316 = vpop.f32.mrf.mxu0
    %v317 = vadd.f32 %v249, %v316
    %v318 = vand.u32 %v72, 4294901760
    %v319 = vsub.f32 %v72, %v318
    %320 = vmatmul.f32.gmra.mxu0 %v319
    %v321 = vpop.f32.mrf.mxu0
    %v322 = vadd.f32 %v253, %v321
    %323 = vdwg.mxu0
    %v324 = vand.u32 %v68, 4294901760
    %325 = vmatpush.xpose.msra.mxu0 %v324
    %v326 = vand.u32 %v67, 4294901760
    %327 = vmatpush.xpose.msra.mxu0 %v326
    %v328 = vand.u32 %v66, 4294901760
    %329 = vmatpush.xpose.msra.mxu0 %v328
    %v330 = vand.u32 %v65, 4294901760
    %331 = vmatpush.xpose.msra.mxu0 %v330
    %v332 = vand.u32 %v64, 4294901760
    %333 = vmatpush.xpose.msra.mxu0 %v332
    %v334 = vand.u32 %v63, 4294901760
    %335 = vmatpush.xpose.msra.mxu0 %v334
    %v336 = vand.u32 %v62, 4294901760
    %337 = vmatpush.xpose.msra.mxu0 %v336
    %v338 = vand.u32 %v61, 4294901760
    %339 = vmatpush.xpose.msra.mxu0 %v338
    %v340 = vand.u32 %v60, 4294901760
    %341 = vmatpush.xpose.msra.mxu0 %v340
    %v342 = vand.u32 %v59, 4294901760
    %343 = vmatpush.xpose.msra.mxu0 %v342
    %v344 = vand.u32 %v58, 4294901760
    %345 = vmatpush.xpose.msra.mxu0 %v344
    %v346 = vand.u32 %v57, 4294901760
    %347 = vmatpush.xpose.msra.mxu0 %v346
    %v348 = vand.u32 %v56, 4294901760
    %349 = vmatpush.xpose.msra.mxu0 %v348
    %v350 = vand.u32 %v55, 4294901760
    %351 = vmatpush.xpose.msra.mxu0 %v350
    %v352 = vand.u32 %v54, 4294901760
    %353 = vmatpush.xpose.msra.mxu0 %v352
    %v354 = vand.u32 %v53, 4294901760
    %355 = vmatpush.xpose.msra.mxu0 %v354
    %v356 = vand.u32 %v69, 4294901760
    %v357 = vsub.f32 %v69, %v356
    %v358 = vand.u32 %v357, 4294901760
    %359 = vmatmul.f32.gmra.mxu0 %v358
    %v360 = vpop.f32.mrf.mxu0
    %v361 = vadd.f32 %v307, %v360
    %v362 = vand.u32 %v70, 4294901760
    %v363 = vsub.f32 %v70, %v362
    %v364 = vand.u32 %v363, 4294901760
    %365 = vmatmul.f32.gmra.mxu0 %v364
    %v366 = vpop.f32.mrf.mxu0
    %v367 = vadd.f32 %v312, %v366
    %v368 = vand.u32 %v71, 4294901760
    %v369 = vsub.f32 %v71, %v368
    %v370 = vand.u32 %v369, 4294901760
    %371 = vmatmul.f32.gmra.mxu0 %v370
    %v372 = vpop.f32.mrf.mxu0
    %v373 = vadd.f32 %v317, %v372
    %v374 = vand.u32 %v72, 4294901760
    %v375 = vsub.f32 %v72, %v374
    %v376 = vand.u32 %v375, 4294901760
    %377 = vmatmul.f32.gmra.mxu0 %v376
    %v378 = vpop.f32.mrf.mxu0
    %v379 = vadd.f32 %v322, %v378
    %380 = vdwg.mxu0
    %v381 = vand.u32 %v68, 4294901760
    %v382 = vsub.f32 %v68, %v381
    %v383 = vand.u32 %v382, 4294901760
    %384 = vmatpush.xpose.msra.mxu0 %v383
    %v385 = vand.u32 %v67, 4294901760
    %v386 = vsub.f32 %v67, %v385
    %v387 = vand.u32 %v386, 4294901760
    %388 = vmatpush.xpose.msra.mxu0 %v387
    %v389 = vand.u32 %v66, 4294901760
    %v390 = vsub.f32 %v66, %v389
    %v391 = vand.u32 %v390, 4294901760
    %392 = vmatpush.xpose.msra.mxu0 %v391
    %v393 = vand.u32 %v65, 4294901760
    %v394 = vsub.f32 %v65, %v393
    %v395 = vand.u32 %v394, 4294901760
    %396 = vmatpush.xpose.msra.mxu0 %v395
    %v397 = vand.u32 %v64, 4294901760
    %v398 = vsub.f32 %v64, %v397
    %v399 = vand.u32 %v398, 4294901760
    %400 = vmatpush.xpose.msra.mxu0 %v399
    %v401 = vand.u32 %v63, 4294901760
    %v402 = vsub.f32 %v63, %v401
    %v403 = vand.u32 %v402, 4294901760
    %404 = vmatpush.xpose.msra.mxu0 %v403
    %v405 = vand.u32 %v62, 4294901760
    %v406 = vsub.f32 %v62, %v405
    %v407 = vand.u32 %v406, 4294901760
    %408 = vmatpush.xpose.msra.mxu0 %v407
    %v409 = vand.u32 %v61, 4294901760
    %v410 = vsub.f32 %v61, %v409
    %v411 = vand.u32 %v410, 4294901760
    %412 = vmatpush.xpose.msra.mxu0 %v411
    %v413 = vand.u32 %v60, 4294901760
    %v414 = vsub.f32 %v60, %v413
    %v415 = vand.u32 %v414, 4294901760
    %416 = vmatpush.xpose.msra.mxu0 %v415
    %v417 = vand.u32 %v59, 4294901760
    %v418 = vsub.f32 %v59, %v417
    %v419 = vand.u32 %v418, 4294901760
    %420 = vmatpush.xpose.msra.mxu0 %v419
    %v421 = vand.u32 %v58, 4294901760
    %v422 = vsub.f32 %v58, %v421
    %v423 = vand.u32 %v422, 4294901760
    %424 = vmatpush.xpose.msra.mxu0 %v423
    %v425 = vand.u32 %v57, 4294901760
    %v426 = vsub.f32 %v57, %v425
    %v427 = vand.u32 %v426, 4294901760
    %428 = vmatpush.xpose.msra.mxu0 %v427
    %v429 = vand.u32 %v56, 4294901760
    %v430 = vsub.f32 %v56, %v429
    %v431 = vand.u32 %v430, 4294901760
    %432 = vmatpush.xpose.msra.mxu0 %v431
    %v433 = vand.u32 %v55, 4294901760
    %v434 = vsub.f32 %v55, %v433
    %v435 = vand.u32 %v434, 4294901760
    %436 = vmatpush.xpose.msra.mxu0 %v435
    %v437 = vand.u32 %v54, 4294901760
    %v438 = vsub.f32 %v54, %v437
    %v439 = vand.u32 %v438, 4294901760
    %440 = vmatpush.xpose.msra.mxu0 %v439
    %v441 = vand.u32 %v53, 4294901760
    %v442 = vsub.f32 %v53, %v441
    %v443 = vand.u32 %v442, 4294901760
    %444 = vmatpush.xpose.msra.mxu0 %v443
    %v445 = vand.u32 %v69, 4294901760
    %446 = vmatmul.f32.gmra.mxu0 %v445
    %v447 = vpop.f32.mrf.mxu0
    %v448 = vadd.f32 %v361, %v447
    %v449 = vand.u32 %v70, 4294901760
    %450 = vmatmul.f32.gmra.mxu0 %v449
    %v451 = vpop.f32.mrf.mxu0
    %v452 = vadd.f32 %v367, %v451
    %v453 = vand.u32 %v71, 4294901760
    %454 = vmatmul.f32.gmra.mxu0 %v453
    %v455 = vpop.f32.mrf.mxu0
    %v456 = vadd.f32 %v373, %v455
    %v457 = vand.u32 %v72, 4294901760
    %458 = vmatmul.f32.gmra.mxu0 %v457
    %v459 = vpop.f32.mrf.mxu0
    %v460 = vadd.f32 %v379, %v459
    %461 = vdwg.mxu0
    %v462 = vand.u32 %v68, 4294901760
    %463 = vmatpush.xpose.msra.mxu0 %v462
    %v464 = vand.u32 %v67, 4294901760
    %465 = vmatpush.xpose.msra.mxu0 %v464
    %v466 = vand.u32 %v66, 4294901760
    %467 = vmatpush.xpose.msra.mxu0 %v466
    %v468 = vand.u32 %v65, 4294901760
    %469 = vmatpush.xpose.msra.mxu0 %v468
    %v470 = vand.u32 %v64, 4294901760
    %471 = vmatpush.xpose.msra.mxu0 %v470
    %v472 = vand.u32 %v63, 4294901760
    %473 = vmatpush.xpose.msra.mxu0 %v472
    %v474 = vand.u32 %v62, 4294901760
    %475 = vmatpush.xpose.msra.mxu0 %v474
    %v476 = vand.u32 %v61, 4294901760
    %477 = vmatpush.xpose.msra.mxu0 %v476
    %v478 = vand.u32 %v60, 4294901760
    %479 = vmatpush.xpose.msra.mxu0 %v478
    %v480 = vand.u32 %v59, 4294901760
    %481 = vmatpush.xpose.msra.mxu0 %v480
    %v482 = vand.u32 %v58, 4294901760
    %483 = vmatpush.xpose.msra.mxu0 %v482
    %v484 = vand.u32 %v57, 4294901760
    %485 = vmatpush.xpose.msra.mxu0 %v484
    %v486 = vand.u32 %v56, 4294901760
    %487 = vmatpush.xpose.msra.mxu0 %v486
    %v488 = vand.u32 %v55, 4294901760
    %489 = vmatpush.xpose.msra.mxu0 %v488
    %v490 = vand.u32 %v54, 4294901760
    %491 = vmatpush.xpose.msra.mxu0 %v490
    %v492 = vand.u32 %v53, 4294901760
    %493 = vmatpush.xpose.msra.mxu0 %v492
    %v494 = vand.u32 %v69, 4294901760
    %495 = vmatmul.f32.gmra.mxu0 %v494
    %v496 = vpop.f32.mrf.mxu0
    %v497 = vadd.f32 %v448, %v496
    %v498 = vand.u32 %v70, 4294901760
    %499 = vmatmul.f32.gmra.mxu0 %v498
    %v500 = vpop.f32.mrf.mxu0
    %v501 = vadd.f32 %v452, %v500
    %v502 = vand.u32 %v71, 4294901760
    %503 = vmatmul.f32.gmra.mxu0 %v502
    %v504 = vpop.f32.mrf.mxu0
    %v505 = vadd.f32 %v456, %v504
    %v506 = vand.u32 %v72, 4294901760
    %507 = vmatmul.f32.gmra.mxu0 %v506
    %v508 = vpop.f32.mrf.mxu0
    %v509 = vadd.f32 %v460, %v508
    %510 = vdwg.mxu0
    %v511 = vadd.f32 %v73, %v497
    %v512 = vadd.f32 %v74, %v501
    %v513 = vadd.f32 %v75, %v505
    %v514 = vadd.f32 %v76, %v509
    %515 = vst [vmem:[#allocation2] sm:$0xff] %v511
    %516 = vst [vmem:[#allocation2 + $0x8] sm:$0xff] %v512
    %517 = vst [vmem:[#allocation2 + $0x10] sm:$0xff] %v513
    %518 = vst [vmem:[#allocation2 + $0x18] sm:$0xff] %v514
    %v519 = vld [vmem:[#allocation3] sm:$0xff]
    %v520 = vmul.f32 %v53, %v53
    %v521 = vmul.f32 %v54, %v54
    %v522 = vmul.f32 %v55, %v55
    %v523 = vmul.f32 %v56, %v56
    %v524 = vmul.f32 %v57, %v57
    %v525 = vmul.f32 %v58, %v58
    %v526 = vmul.f32 %v59, %v59
    %v527 = vmul.f32 %v60, %v60
    %v528 = vmul.f32 %v61, %v61
    %v529 = vmul.f32 %v62, %v62
    %v530 = vmul.f32 %v63, %v63
    %v531 = vmul.f32 %v64, %v64
    %v532 = vmul.f32 %v65, %v65
    %v533 = vmul.f32 %v66, %v66
    %v534 = vmul.f32 %v67, %v67
    %v535 = vmul.f32 %v68, %v68
    %v536 = vand.u32 %v535, 4294901760
    %537 = vmatpush.xpose.msra.mxu0 %v536
    %v538 = vand.u32 %v534, 4294901760
    %539 = vmatpush.xpose.msra.mxu0 %v538
    %v540 = vand.u32 %v533, 4294901760
    %541 = vmatpush.xpose.msra.mxu0 %v540
    %v542 = vand.u32 %v532, 4294901760
    %543 = vmatpush.xpose.msra.mxu0 %v542
    %v544 = vand.u32 %v531, 4294901760
    %545 = vmatpush.xpose.msra.mxu0 %v544
    %v546 = vand.u32 %v530, 4294901760
    %547 = vmatpush.xpose.msra.mxu0 %v546
    %v548 = vand.u32 %v529, 4294901760
    %549 = vmatpush.xpose.msra.mxu0 %v548
    %v550 = vand.u32 %v528, 4294901760
    %551 = vmatpush.xpose.msra.mxu0 %v550
    %v552 = vand.u32 %v527, 4294901760
    %553 = vmatpush.xpose.msra.mxu0 %v552
    %v554 = vand.u32 %v526, 4294901760
    %555 = vmatpush.xpose.msra.mxu0 %v554
    %v556 = vand.u32 %v525, 4294901760
    %557 = vmatpush.xpose.msra.mxu0 %v556
    %v558 = vand.u32 %v524, 4294901760
    %559 = vmatpush.xpose.msra.mxu0 %v558
    %v560 = vand.u32 %v523, 4294901760
    %561 = vmatpush.xpose.msra.mxu0 %v560
    %v562 = vand.u32 %v522, 4294901760
    %563 = vmatpush.xpose.msra.mxu0 %v562
    %v564 = vand.u32 %v521, 4294901760
    %565 = vmatpush.xpose.msra.mxu0 %v564
    %v566 = vand.u32 %v520, 4294901760
    %567 = vmatpush.xpose.msra.mxu0 %v566
    %568 = vmatmul.f32.gmra.mxu0 0.0
    %v569 = vpop.f32.mrf.mxu0
    %v570 = vadd.f32 0.0, %v569
    %571 = vdwg.mxu0
    %v572 = vand.u32 %v535, 4294901760
    %v573 = vsub.f32 %v535, %v572
    %v574 = vand.u32 %v573, 4294901760
    %v575 = vsub.f32 %v573, %v574
    %v576 = vand.u32 %v575, 4294901760
    %577 = vmatpush.xpose.msra.mxu0 %v576
    %v578 = vand.u32 %v534, 4294901760
    %v579 = vsub.f32 %v534, %v578
    %v580 = vand.u32 %v579, 4294901760
    %v581 = vsub.f32 %v579, %v580
    %v582 = vand.u32 %v581, 4294901760
    %583 = vmatpush.xpose.msra.mxu0 %v582
    %v584 = vand.u32 %v533, 4294901760
    %v585 = vsub.f32 %v533, %v584
    %v586 = vand.u32 %v585, 4294901760
    %v587 = vsub.f32 %v585, %v586
    %v588 = vand.u32 %v587, 4294901760
    %589 = vmatpush.xpose.msra.mxu0 %v588
    %v590 = vand.u32 %v532, 4294901760
    %v591 = vsub.f32 %v532, %v590
    %v592 = vand.u32 %v591, 4294901760
    %v593 = vsub.f32 %v591, %v592
    %v594 = vand.u32 %v593, 4294901760
    %595 = vmatpush.xpose.msra.mxu0 %v594
    %v596 = vand.u32 %v531, 4294901760
    %v597 = vsub.f32 %v531, %v596
    %v598 = vand.u32 %v597, 4294901760
    %v599 = vsub.f32 %v597, %v598
    %v600 = vand.u32 %v599, 4294901760
    %601 = vmatpush.xpose.msra.mxu0 %v600
    %v602 = vand.u32 %v530, 4294901760
    %v603 = vsub.f32 %v530, %v602
    %v604 = vand.u32 %v603, 4294901760
    %v605 = vsub.f32 %v603, %v604
    %v606 = vand.u32 %v605, 4294901760
    %607 = vmatpush.xpose.msra.mxu0 %v606
    %v608 = vand.u32 %v529, 4294901760
    %v609 = vsub.f32 %v529, %v608
    %v610 = vand.u32 %v609, 4294901760
    %v611 = vsub.f32 %v609, %v610
    %v612 = vand.u32 %v611, 4294901760
    %613 = vmatpush.xpose.msra.mxu0 %v612
    %v614 = vand.u32 %v528, 4294901760
    %v615 = vsub.f32 %v528, %v614
    %v616 = vand.u32 %v615, 4294901760
    %v617 = vsub.f32 %v615, %v616
    %v618 = vand.u32 %v617, 4294901760
    %619 = vmatpush.xpose.msra.mxu0 %v618
    %v620 = vand.u32 %v527, 4294901760
    %v621 = vsub.f32 %v527, %v620
    %v622 = vand.u32 %v621, 4294901760
    %v623 = vsub.f32 %v621, %v622
    %v624 = vand.u32 %v623, 4294901760
    %625 = vmatpush.xpose.msra.mxu0 %v624
    %v626 = vand.u32 %v526, 4294901760
    %v627 = vsub.f32 %v526, %v626
    %v628 = vand.u32 %v627, 4294901760
    %v629 = vsub.f32 %v627, %v628
    %v630 = vand.u32 %v629, 4294901760
    %631 = vmatpush.xpose.msra.mxu0 %v630
    %v632 = vand.u32 %v525, 4294901760
    %v633 = vsub.f32 %v525, %v632
    %v634 = vand.u32 %v633, 4294901760
    %v635 = vsub.f32 %v633, %v634
    %v636 = vand.u32 %v635, 4294901760
    %637 = vmatpush.xpose.msra.mxu0 %v636
    %v638 = vand.u32 %v524, 4294901760
    %v639 = vsub.f32 %v524, %v638
    %v640 = vand.u32 %v639, 4294901760
    %v641 = vsub.f32 %v639, %v640
    %v642 = vand.u32 %v641, 4294901760
    %643 = vmatpush.xpose.msra.mxu0 %v642
    %v644 = vand.u32 %v523, 4294901760
    %v645 = vsub.f32 %v523, %v644
    %v646 = vand.u32 %v645, 4294901760
    %v647 = vsub.f32 %v645, %v646
    %v648 = vand.u32 %v647, 4294901760
    %649 = vmatpush.xpose.msra.mxu0 %v648
    %v650 = vand.u32 %v522, 4294901760
    %v651 = vsub.f32 %v522, %v650
    %v652 = vand.u32 %v651, 4294901760
    %v653 = vsub.f32 %v651, %v652
    %v654 = vand.u32 %v653, 4294901760
    %655 = vmatpush.xpose.msra.mxu0 %v654
    %v656 = vand.u32 %v521, 4294901760
    %v657 = vsub.f32 %v521, %v656
    %v658 = vand.u32 %v657, 4294901760
    %v659 = vsub.f32 %v657, %v658
    %v660 = vand.u32 %v659, 4294901760
    %661 = vmatpush.xpose.msra.mxu0 %v660
    %v662 = vand.u32 %v520, 4294901760
    %v663 = vsub.f32 %v520, %v662
    %v664 = vand.u32 %v663, 4294901760
    %v665 = vsub.f32 %v663, %v664
    %v666 = vand.u32 %v665, 4294901760
    %667 = vmatpush.xpose.msra.mxu0 %v666
    %668 = vmatmul.f32.gmra.mxu0 1.0
    %v669 = vpop.f32.mrf.mxu0
    %v670 = vadd.f32 %v570, %v669
    %671 = vdwg.mxu0
    %v672 = vand.u32 %v535, 4294901760
    %v673 = vsub.f32 %v535, %v672
    %674 = vmatpush.xpose.msra.mxu0 %v673
    %v675 = vand.u32 %v534, 4294901760
    %v676 = vsub.f32 %v534, %v675
    %677 = vmatpush.xpose.msra.mxu0 %v676
    %v678 = vand.u32 %v533, 4294901760
    %v679 = vsub.f32 %v533, %v678
    %680 = vmatpush.xpose.msra.mxu0 %v679
    %v681 = vand.u32 %v532, 4294901760
    %v682 = vsub.f32 %v532, %v681
    %683 = vmatpush.xpose.msra.mxu0 %v682
    %v684 = vand.u32 %v531, 4294901760
    %v685 = vsub.f32 %v531, %v684
    %686 = vmatpush.xpose.msra.mxu0 %v685
    %v687 = vand.u32 %v530, 4294901760
    %v688 = vsub.f32 %v530, %v687
    %689 = vmatpush.xpose.msra.mxu0 %v688
    %v690 = vand.u32 %v529, 4294901760
    %v691 = vsub.f32 %v529, %v690
    %692 = vmatpush.xpose.msra.mxu0 %v691
    %v693 = vand.u32 %v528, 4294901760
    %v694 = vsub.f32 %v528, %v693
    %695 = vmatpush.xpose.msra.mxu0 %v694
    %v696 = vand.u32 %v527, 4294901760
    %v697 = vsub.f32 %v527, %v696
    %698 = vmatpush.xpose.msra.mxu0 %v697
    %v699 = vand.u32 %v526, 4294901760
    %v700 = vsub.f32 %v526, %v699
    %701 = vmatpush.xpose.msra.mxu0 %v700
    %v702 = vand.u32 %v525, 4294901760
    %v703 = vsub.f32 %v525, %v702
    %704 = vmatpush.xpose.msra.mxu0 %v703
    %v705 = vand.u32 %v524, 4294901760
    %v706 = vsub.f32 %v524, %v705
    %707 = vmatpush.xpose.msra.mxu0 %v706
    %v708 = vand.u32 %v523, 4294901760
    %v709 = vsub.f32 %v523, %v708
    %710 = vmatpush.xpose.msra.mxu0 %v709
    %v711 = vand.u32 %v522, 4294901760
    %v712 = vsub.f32 %v522, %v711
    %713 = vmatpush.xpose.msra.mxu0 %v712
    %v714 = vand.u32 %v521, 4294901760
    %v715 = vsub.f32 %v521, %v714
    %716 = vmatpush.xpose.msra.mxu0 %v715
    %v717 = vand.u32 %v520, 4294901760
    %v718 = vsub.f32 %v520, %v717
    %719 = vmatpush.xpose.msra.mxu0 %v718
    %720 = vmatmul.f32.gmra.mxu0 0.0
    %v721 = vpop.f32.mrf.mxu0
    %v722 = vadd.f32 %v670, %v721
    %723 = vdwg.mxu0
    %v724 = vand.u32 %v535, 4294901760
    %725 = vmatpush.xpose.msra.mxu0 %v724
    %v726 = vand.u32 %v534, 4294901760
    %727 = vmatpush.xpose.msra.mxu0 %v726
    %v728 = vand.u32 %v533, 4294901760
    %729 = vmatpush.xpose.msra.mxu0 %v728
    %v730 = vand.u32 %v532, 4294901760
    %731 = vmatpush.xpose.msra.mxu0 %v730
    %v732 = vand.u32 %v531, 4294901760
    %733 = vmatpush.xpose.msra.mxu0 %v732
    %v734 = vand.u32 %v530, 4294901760
    %735 = vmatpush.xpose.msra.mxu0 %v734
    %v736 = vand.u32 %v529, 4294901760
    %737 = vmatpush.xpose.msra.mxu0 %v736
    %v738 = vand.u32 %v528, 4294901760
    %739 = vmatpush.xpose.msra.mxu0 %v738
    %v740 = vand.u32 %v527, 4294901760
    %741 = vmatpush.xpose.msra.mxu0 %v740
    %v742 = vand.u32 %v526, 4294901760
    %743 = vmatpush.xpose.msra.mxu0 %v742
    %v744 = vand.u32 %v525, 4294901760
    %745 = vmatpush.xpose.msra.mxu0 %v744
    %v746 = vand.u32 %v524, 4294901760
    %747 = vmatpush.xpose.msra.mxu0 %v746
    %v748 = vand.u32 %v523, 4294901760
    %749 = vmatpush.xpose.msra.mxu0 %v748
    %v750 = vand.u32 %v522, 4294901760
    %751 = vmatpush.xpose.msra.mxu0 %v750
    %v752 = vand.u32 %v521, 4294901760
    %753 = vmatpush.xpose.msra.mxu0 %v752
    %v754 = vand.u32 %v520, 4294901760
    %755 = vmatpush.xpose.msra.mxu0 %v754
    %756 = vmatmul.f32.gmra.mxu0 0.0
    %v757 = vpop.f32.mrf.mxu0
    %v758 = vadd.f32 %v722, %v757
    %759 = vdwg.mxu0
    %v760 = vand.u32 %v535, 4294901760
    %v761 = vsub.f32 %v535, %v760
    %v762 = vand.u32 %v761, 4294901760
    %763 = vmatpush.xpose.msra.mxu0 %v762
    %v764 = vand.u32 %v534, 4294901760
    %v765 = vsub.f32 %v534, %v764
    %v766 = vand.u32 %v765, 4294901760
    %767 = vmatpush.xpose.msra.mxu0 %v766
    %v768 = vand.u32 %v533, 4294901760
    %v769 = vsub.f32 %v533, %v768
    %v770 = vand.u32 %v769, 4294901760
    %771 = vmatpush.xpose.msra.mxu0 %v770
    %v772 = vand.u32 %v532, 4294901760
    %v773 = vsub.f32 %v532, %v772
    %v774 = vand.u32 %v773, 4294901760
    %775 = vmatpush.xpose.msra.mxu0 %v774
    %v776 = vand.u32 %v531, 4294901760
    %v777 = vsub.f32 %v531, %v776
    %v778 = vand.u32 %v777, 4294901760
    %779 = vmatpush.xpose.msra.mxu0 %v778
    %v780 = vand.u32 %v530, 4294901760
    %v781 = vsub.f32 %v530, %v780
    %v782 = vand.u32 %v781, 4294901760
    %783 = vmatpush.xpose.msra.mxu0 %v782
    %v784 = vand.u32 %v529, 4294901760
    %v785 = vsub.f32 %v529, %v784
    %v786 = vand.u32 %v785, 4294901760
    %787 = vmatpush.xpose.msra.mxu0 %v786
    %v788 = vand.u32 %v528, 4294901760
    %v789 = vsub.f32 %v528, %v788
    %v790 = vand.u32 %v789, 4294901760
    %791 = vmatpush.xpose.msra.mxu0 %v790
    %v792 = vand.u32 %v527, 4294901760
    %v793 = vsub.f32 %v527, %v792
    %v794 = vand.u32 %v793, 4294901760
    %795 = vmatpush.xpose.msra.mxu0 %v794
    %v796 = vand.u32 %v526, 4294901760
    %v797 = vsub.f32 %v526, %v796
    %v798 = vand.u32 %v797, 4294901760
    %799 = vmatpush.xpose.msra.mxu0 %v798
    %v800 = vand.u32 %v525, 4294901760
    %v801 = vsub.f32 %v525, %v800
    %v802 = vand.u32 %v801, 4294901760
    %803 = vmatpush.xpose.msra.mxu0 %v802
    %v804 = vand.u32 %v524, 4294901760
    %v805 = vsub.f32 %v524, %v804
    %v806 = vand.u32 %v805, 4294901760
    %807 = vmatpush.xpose.msra.mxu0 %v806
    %v808 = vand.u32 %v523, 4294901760
    %v809 = vsub.f32 %v523, %v808
    %v810 = vand.u32 %v809, 4294901760
    %811 = vmatpush.xpose.msra.mxu0 %v810
    %v812 = vand.u32 %v522, 4294901760
    %v813 = vsub.f32 %v522, %v812
    %v814 = vand.u32 %v813, 4294901760
    %815 = vmatpush.xpose.msra.mxu0 %v814
    %v816 = vand.u32 %v521, 4294901760
    %v817 = vsub.f32 %v521, %v816
    %v818 = vand.u32 %v817, 4294901760
    %819 = vmatpush.xpose.msra.mxu0 %v818
    %v820 = vand.u32 %v520, 4294901760
    %v821 = vsub.f32 %v520, %v820
    %v822 = vand.u32 %v821, 4294901760
    %823 = vmatpush.xpose.msra.mxu0 %v822
    %824 = vmatmul.f32.gmra.mxu0 1.0
    %v825 = vpop.f32.mrf.mxu0
    %v826 = vadd.f32 %v758, %v825
    %827 = vdwg.mxu0
    %v828 = vand.u32 %v535, 4294901760
    %829 = vmatpush.xpose.msra.mxu0 %v828
    %v830 = vand.u32 %v534, 4294901760
    %831 = vmatpush.xpose.msra.mxu0 %v830
    %v832 = vand.u32 %v533, 4294901760
    %833 = vmatpush.xpose.msra.mxu0 %v832
    %v834 = vand.u32 %v532, 4294901760
    %835 = vmatpush.xpose.msra.mxu0 %v834
    %v836 = vand.u32 %v531, 4294901760
    %837 = vmatpush.xpose.msra.mxu0 %v836
    %v838 = vand.u32 %v530, 4294901760
    %839 = vmatpush.xpose.msra.mxu0 %v838
    %v840 = vand.u32 %v529, 4294901760
    %841 = vmatpush.xpose.msra.mxu0 %v840
    %v842 = vand.u32 %v528, 4294901760
    %843 = vmatpush.xpose.msra.mxu0 %v842
    %v844 = vand.u32 %v527, 4294901760
    %845 = vmatpush.xpose.msra.mxu0 %v844
    %v846 = vand.u32 %v526, 4294901760
    %847 = vmatpush.xpose.msra.mxu0 %v846
    %v848 = vand.u32 %v525, 4294901760
    %849 = vmatpush.xpose.msra.mxu0 %v848
    %v850 = vand.u32 %v524, 4294901760
    %851 = vmatpush.xpose.msra.mxu0 %v850
    %v852 = vand.u32 %v523, 4294901760
    %853 = vmatpush.xpose.msra.mxu0 %v852
    %v854 = vand.u32 %v522, 4294901760
    %855 = vmatpush.xpose.msra.mxu0 %v854
    %v856 = vand.u32 %v521, 4294901760
    %857 = vmatpush.xpose.msra.mxu0 %v856
    %v858 = vand.u32 %v520, 4294901760
    %859 = vmatpush.xpose.msra.mxu0 %v858
    %860 = vmatmul.f32.gmra.mxu0 1.0
    %v861 = vpop.f32.mrf.mxu0
    %v862 = vadd.f32 %v826, %v861
    %863 = vdwg.mxu0
    %v864 = vadd.f32 %v519, %v862
    %865 = vst [vmem:[#allocation3] sm:$0xff] %v864
    // Predicated region
    $region22: #{tpu_custom_call.1} parent=1 // pred_check
      %p866 = pneg %p44
    $region23: #{tpu_custom_call.1} parent=1 // pred_check_branch
      %868 = sbr.rel (%p866) target = $region25
    $region24: #{tpu_custom_call.1} parent=1 // pred_region
      %v869 = vld [vmem:[#allocation3] sm:$0x1]
      %v870 = vmax.f32 %v869, 1e-10
      %v871 = vrsqrt.pop %v870
      %v872 = vmul.f32 %v871, %v870
      %v873 = vmul.f32 %v872, %v871
      %v874 = vmul.f32 0.5, %v873
      %v875 = vsub.f32 1.5, %v874
      %v876 = vmul.f32 %v871, %v875
      %vm877 = vweird.f32 %v870
      %vm878 = vweird.f32 %v871
      %vm879 = vmor %vm877, %vm878
      %v880 = vsel %vm879, %v871, %v876
      %v881 = vld [vmem:[#allocation2] sm:$0xff]
      %v882 = vld [vmem:[#allocation2 + $0x8] sm:$0xff]
      %v883 = vld [vmem:[#allocation2 + $0x10] sm:$0xff]
      %v884 = vld [vmem:[#allocation2 + $0x18] sm:$0xff]
      %v885 = vperm.slane %v880, 0
      %v886 = vmul.f32 %v881, %v885
      %v887 = vmul.f32 %v882, %v885
      %v888 = vmul.f32 %v883, %v885
      %v889 = vmul.f32 %v884, %v885
      %890 = vst [vmem:[#allocation9] sm:$0xff] %v886
      %891 = vst [vmem:[#allocation9 + $0x8] sm:$0xff] %v887
      %892 = vst [vmem:[#allocation9 + $0x10] sm:$0xff] %v888
      %893 = vst [vmem:[#allocation9 + $0x18] sm:$0xff] %v889
    $region25: #{tpu_custom_call.1} parent=1 // pred_fallthru
      _
    // Predicated region
    $region26: #{tpu_custom_call.1} parent=1 // pred_check
      _
    $region27: #{tpu_custom_call.1} parent=1 // pred_check_branch
      %895 = sbr.rel (0) target = $region29
    $region28: #{tpu_custom_call.1} parent=1 // pred_region
      %897 = vsyncadd [#allocation6], 0
      %s898 = sshll.u32 [#allocation9], 4
      %s899 = int_to_ptr.vmem [resolvable:$true] %s898
      %s900 = sshll.u32 %s2, 4
      %s901 = int_to_ptr.hbm [resolvable:$true] %s900
      %906 = dma.vmem_to_hbm [thread:$0]  %s899, 512, %s901, [#allocation6], 128, 128, 8
    $region29: #{tpu_custom_call.1} parent=1 // pred_fallthru
      _
    // Predicated region
    $region30: #{tpu_custom_call.1} parent=1 // pred_check
      _
    $region31: #{tpu_custom_call.1} parent=1 // pred_check_branch
      %908 = sbr.rel (0) target = $region33
    $region32: #{tpu_custom_call.1} parent=1 // pred_region
      %910 = dma.done [#allocation6], 512
    $region33: #{tpu_custom_call.1} parent=1 // pred_fallthru
      _
    %911 = vsyncpa [#allocation5], 1
    %912 = vsyncpa [#allocation8], 1
    %913 = vsyncpa [#allocation6], 1

</llo_original>
